<compile_context>
chip_gen: v7x
topology: tpu7x:2x2x1
jax: 0.10.0
libtpu: 0.0.40
codegen_flags: <defaults>
</compile_context>

<pallas_src>
import numpy as np

import jax
import jax.numpy as jnp
from jax.experimental import pallas as pl
from jax.experimental.pallas import tpu as pltpu


def _convT_kernel(x_ref, w_ref, b_ref, o_ref):
    # x_ref: (Mp, KD_pad)    bf16 im2col window slab (rows = N*A, lane-padded K)
    # w_ref: (KD_pad, NCOL)  bf16 block-Toeplitz phase weight
    # b_ref: (1, NCOL)       f32 bias row (o fastest)
    # o_ref: (Mp, NCOL)      f32 phase-major output slab (lane-dense)
    acc = jnp.dot(x_ref[...], w_ref[...], preferred_element_type=jnp.float32)
    acc = acc + b_ref[...]                      # bias
    acc = jnp.maximum(acc, 0.0)                 # activation='relu'
    # TODO(synk): norm branches ('bn'/'in'/'ln'/'adain') not instantiated —
    # module default is norm='none'.
    o_ref[...] = acc.astype(o_ref.dtype)


def make_conv_transpose2d_block(weight, bias, *, stride, padding=0,
                                output_padding=0, input_size,
                                compute_dtype=jnp.bfloat16):
    """Precompute the phase weight once; return a jitted forward(x_nchw).

    weight: (C_in, C_out, K, K) — PyTorch ConvTranspose2d layout.
    input_size: (H, W) expected spatial size of the input.
    """
    C_in, C_out, K, _ = weight.shape
    s = stride
    H, W = input_size
    H_out = (H - 1) * s - 2 * padding + K + output_padding
    W_out = (W - 1) * s - 2 * padding + K + output_padding
    # TODO(synk): no fallback path when stride does not divide the output size.
    assert H_out % s == 0 and W_out % s == 0, (
        "phase-decomposition fast path requires stride | output size")
    A, Wc = H_out // s, W_out // s              # rows / cols per output phase

    # ---- static phase geometry ------------------------------------------------
    # ConvTranspose2d: oh = ih*s - padding + kh.  Write oh = a*s + r, then
    # kh = m*s + r + padding with m = a - ih.
    taps = [[((k - r - padding) // s, k)
             for k in range(K) if (k - r - padding) % s == 0]
            for r in range(s)]
    all_m = [m for tl in taps for m, _ in tl]
    m_min, m_max = min(all_m), max(all_m)
    pad_top = max(0, m_max)
    pad_bot = max(0, A - m_min - H)
    D = pad_top - m_min + 1                     # height window size (un-dilated)
    Hp = H + pad_top + pad_bot

    # ---- trace-time constant selection tensors (numpy) ------------------------
    # Sh[r, dh, kh] = 1 iff window row-offset dh uses kernel row kh for phase r.
    Sh = np.zeros((s, D, K), np.float32)
    for r in range(s):
        for dh in range(D):
            kh = (pad_top - dh) * s + r + padding
            if 0 <= kh < K:
                Sh[r, dh, kh] = 1.0
    # Sw[rw, j, iw, kw] = 1 iff output phase-column j uses input column iw with
    # kernel column kw for width-phase rw (width zero-pad folded in).
    Sw = np.zeros((s, Wc, W, K), np.float32)
    for r in range(s):
        for j in range(Wc):
            for m, kw in taps[r]:
                iw = j - m
                if 0 <= iw < W:
                    Sw[r, j, iw, kw] = 1.0

    # ---- block-Toeplitz phase weight (built ONCE, not per forward call) -------
    KD = D * W * C_in
    KD_pad = -(-KD // 128) * 128                # lane-align contraction (v5e MXU)
    NCOL = Wc * s * s * C_out                   # columns packed (j, rh, rw, o)

    w_t = jnp.einsum('rdh,sjiw,cohw->dicjrso',
                     jnp.asarray(Sh), jnp.asarray(Sw),
                     jnp.asarray(weight, jnp.float32))
    w_t = w_t.reshape(KD, NCOL)
    w_t = jnp.pad(w_t, ((0, KD_pad - KD), (0, 0))).astype(compute_dtype)
    b_row = jnp.tile(jnp.asarray(bias, jnp.float32), Wc * s * s).reshape(1, NCOL)

    @jax.jit
    def forward(x_nchw):
        N = x_nchw.shape[0]
        # ---- input: NCHW -> padded NHWC -> im2col window slab -----------------
        x = jnp.transpose(x_nchw, (0, 2, 3, 1))             # (N, H, W, C_in)
        x = jnp.pad(x, ((0, 0), (pad_top, pad_bot), (0, 0), (0, 0)))
        # slab[n, a, d, iw, c] = x_pad[n, a + d, iw, c]
        win = jnp.stack([x[:, d:d + A] for d in range(D)], axis=2)
        slab = win.reshape(N * A, KD).astype(compute_dtype)
        M = N * A
        Mp = -(-M // 8) * 8                                  # sublane-align rows
        slab = jnp.pad(slab, ((0, Mp - M), (0, KD_pad - KD)))

        out_slab = pl.pallas_call(
            _convT_kernel,
            out_shape=jax.ShapeDtypeStruct((Mp, NCOL), jnp.float32),
            grid_spec=pltpu.PrefetchScalarGridSpec(
                num_scalar_prefetch=0,
                grid=(1,),                                   # single fat step
                in_specs=[
                    pl.BlockSpec((Mp, KD_pad), lambda i: (0, 0)),
                    pl.BlockSpec((KD_pad, NCOL), lambda i: (0, 0)),
                    pl.BlockSpec((1, NCOL), lambda i: (0, 0)),
                ],
                out_specs=pl.BlockSpec((Mp, NCOL), lambda i: (0, 0)),
            ),
            compiler_params=pltpu.CompilerParams(
                dimension_semantics=("arbitrary",),
                vmem_limit_bytes=32 * 1024 * 1024),
        )(slab, w_t, b_row)

        # ---- phase de-interleave folded into the mandatory NCHW conversion ----
        out = out_slab[:M].reshape(N, A, Wc, s, s, C_out)
        out = jnp.transpose(out, (0, 5, 1, 3, 2, 4))         # (N,Co,A,rh,Wc,rw)
        return out.reshape(N, C_out, H_out, W_out)

    return forward


def _reference(x_nchw, weight, bias, *, stride, padding, output_padding, K):
    # Pure-JAX reference via XLA dilated conv (same math, no Pallas).
    w = jnp.transpose(weight[:, :, ::-1, ::-1], (1, 0, 2, 3))  # (C_out, C_in, K, K)
    pad = (K - 1 - padding, K - 1 - padding + output_padding)
    y = jax.lax.conv_general_dilated(
        x_nchw, w, window_strides=(1, 1), padding=(pad, pad),
        lhs_dilation=(stride, stride),
        dimension_numbers=("NCHW", "OIHW", "NCHW"))
    y = y + bias.reshape(1, -1, 1, 1)
    return jnp.maximum(y, 0.0)


if __name__ == "__main__":
    # Module config: ConvTranspose2dBlock(input_dim=4, output_dim=8,
    #   kernel_size=4, stride=2, padding=1, norm='none', activation='relu')
    N, C_in, H, W = 2, 4, 16, 16
    C_out, K, stride, padding, output_padding = 8, 4, 2, 1, 0

    key = jax.random.PRNGKey(0)
    kx, kw, kb = jax.random.split(key, 3)
    x = jax.random.normal(kx, (N, C_in, H, W), dtype=jnp.float32)
    # PyTorch ConvTranspose2d weight shape: (in_channels, out_channels, K, K)
    fan_in = C_in * K * K
    bound = 1.0 / (fan_in ** 0.5)
    weight = jax.random.uniform(kw, (C_in, C_out, K, K),
                                minval=-bound, maxval=bound, dtype=jnp.float32)
    bias = jax.random.uniform(kb, (C_out,),
                              minval=-bound, maxval=bound, dtype=jnp.float32)

    # Build once (weight transform hoisted out of the forward path), then call.
    forward = make_conv_transpose2d_block(
        weight, bias, stride=stride, padding=padding,
        output_padding=output_padding, input_size=(H, W))
    out = jax.block_until_ready(forward(x))

    ref = _reference(x, weight, bias, stride=stride, padding=padding,
                     output_padding=output_padding, K=K)
    H_out = (H - 1) * stride - 2 * padding + K + output_padding
    W_out = (W - 1) * stride - 2 * padding + K + output_padding
    assert out.shape == (N, C_out, H_out, W_out)
    # bf16 MXU operands with f32 accumulation -> loosened tolerance vs f32 ref.
    assert jnp.allclose(out, ref, atol=2e-2, rtol=2e-2), \
        float(jnp.max(jnp.abs(out - ref)))

    print("KERNEL_OK")
</pallas_src>

<mosaic_0001>
module attributes {stable_mosaic.version = 11 : i64} {
  func.func @_convT_kernel(%arg0: i32, %arg1: memref<32x256xbf16, #tpu.memory_space<vmem>>, %arg2: memref<256x512xbf16, #tpu.memory_space<vmem>>, %arg3: memref<1x512xf32, #tpu.memory_space<vmem>>, %arg4: memref<32x512xf32, #tpu.memory_space<vmem>>) attributes {dimension_semantics = [#tpu.dimension_semantics<arbitrary>], iteration_bounds = array<i64: 1>, scalar_prefetch = 0 : i64, scratch_operands = 0 : i64, tpu.core_type = #tpu.core_type<tc>, window_params = [{pipeline_mode = #tpu.pipeline_mode<synchronous>, transform_indices = @transform_0, window_bounds = array<i64: 32, 256>}, {pipeline_mode = #tpu.pipeline_mode<synchronous>, transform_indices = @transform_1, window_bounds = array<i64: 256, 512>}, {pipeline_mode = #tpu.pipeline_mode<synchronous>, transform_indices = @transform_2, window_bounds = array<i64: 1, 512>}, {pipeline_mode = #tpu.pipeline_mode<synchronous>, transform_indices = @transform_3, window_bounds = array<i64: 32, 512>}]} {
    %c0 = arith.constant 0 : index
    %c0_0 = arith.constant 0 : index
    %0 = vector.load %arg1[%c0, %c0_0] : memref<32x256xbf16, #tpu.memory_space<vmem>>, vector<32x256xbf16>
    %c0_1 = arith.constant 0 : index
    %c0_2 = arith.constant 0 : index
    %1 = vector.load %arg2[%c0_1, %c0_2] : memref<256x512xbf16, #tpu.memory_space<vmem>>, vector<256x512xbf16>
    %cst = arith.constant dense<0.000000e+00> : vector<32x512xf32>
    %2 = tpu.matmul %0, %1, %cst {dimension_numbers = #tpu.dot_dimension_numbers<[1], [0], [0], [1], [0, 0, 1, 1], [], []>} : vector<32x256xbf16>, vector<256x512xbf16>, vector<32x512xf32> -> vector<32x512xf32>
    %c0_3 = arith.constant 0 : index
    %c0_4 = arith.constant 0 : index
    %3 = vector.load %arg3[%c0_3, %c0_4] : memref<1x512xf32, #tpu.memory_space<vmem>>, vector<1x512xf32>
    %4 = vector.broadcast %3 : vector<1x512xf32> to vector<32x512xf32>
    %5 = arith.addf %2, %4 : vector<32x512xf32>
    %cst_5 = arith.constant 0.000000e+00 : f32
    %6 = vector.broadcast %cst_5 : f32 to vector<32x512xf32>
    %7 = arith.maximumf %5, %6 : vector<32x512xf32>
    %c0_6 = arith.constant 0 : index
    %c0_7 = arith.constant 0 : index
    %8 = vector.load %arg4[%c0_6, %c0_7] : memref<32x512xf32, #tpu.memory_space<vmem>>, vector<32x512xf32>
    tpu.vector_store %arg4[%c0_6, %c0_7], %7 {strides = array<i32>} : memref<32x512xf32, #tpu.memory_space<vmem>>, vector<32x512xf32>,
    return
  }
  func.func @transform_0(%arg0: i32) -> (i32, i32) {
    %c0_i32 = arith.constant 0 : i32
    %c0_i32_0 = arith.constant 0 : i32
    %c0_i32_1 = arith.constant 0 : i32
    return %c0_i32, %c0_i32_0 : i32, i32
  }
  func.func @transform_1(%arg0: i32) -> (i32, i32) {
    %c0_i32 = arith.constant 0 : i32
    %c0_i32_0 = arith.constant 0 : i32
    %c0_i32_1 = arith.constant 0 : i32
    return %c0_i32, %c0_i32_0 : i32, i32
  }
  func.func @transform_2(%arg0: i32) -> (i32, i32) {
    %c0_i32 = arith.constant 0 : i32
    %c0_i32_0 = arith.constant 0 : i32
    %c0_i32_1 = arith.constant 0 : i32
    return %c0_i32, %c0_i32_0 : i32, i32
  }
  func.func @transform_3(%arg0: i32) -> (i32, i32) {
    %c0_i32 = arith.constant 0 : i32
    %c0_i32_0 = arith.constant 0 : i32
    %c0_i32_1 = arith.constant 0 : i32
    return %c0_i32, %c0_i32_0 : i32, i32
  }
}

</mosaic_0001>

<llo_original>
// kernel: forward.1
$region0: #{forward.1}
  #allocation0 [shape = 'u32[]', space=smem, size = 0x4, offset = 0x4, fixed_abs, tag = 'smem constant byte address 0x4 - core index']
  #allocation1 [shape = 'u32[144,128]{1,0:T(1,128)}', space=vmem, size = 0x12000, scoped, tag = 'internal scratch']
  %s0 = inlined_call_operand.vmem [shape: bf16[32,256], index: 0, kind: input, shape index: {}]
  %s1 = inlined_call_operand.vmem [shape: bf16[256,512], index: 1, kind: input, shape index: {}]
  %s2 = inlined_call_operand.vmem [shape: f32[1,512], index: 2, kind: input, shape index: {}]
  %s3 = inlined_call_operand.vmem [shape: f32[32,512], index: 3, kind: output, shape index: {}]
  %s4 = sld [smem:[#allocation0]]
  $region22: #{forward.1} parent=0
    _
  %s6 = ssub.s32 1, %s4
  %s7 = scalar_select 0, %s6, %s4
  // Predicated region
  $region2: #{forward.1} parent=0 // pred_check
    _
  $region3: #{forward.1} parent=0 // pred_check_branch
    %9 = sbr.rel (0) target = $region5
  $region4: #{forward.1} parent=0 // pred_region
    _
  $region5: #{forward.1} parent=0 // pred_fallthru
    _
  // Predicated region
  $region6: #{forward.1} parent=0 // pred_check
    _
  $region7: #{forward.1} parent=0 // pred_check_branch
    %11 = sbr.rel (0) target = $region9
  $region8: #{forward.1} parent=0 // pred_region
    _
  $region9: #{forward.1} parent=0 // pred_fallthru
    _
  // Predicated region
  $region10: #{forward.1} parent=0 // pred_check
    _
  $region11: #{forward.1} parent=0 // pred_check_branch
    %13 = sbr.rel (0) target = $region13
  $region12: #{forward.1} parent=0 // pred_region
    _
  $region13: #{forward.1} parent=0 // pred_fallthru
    _
  %v14 = vld [vmem:[%s0] sm:$0xff]
  %v15 = vld [vmem:[%s0 + $0x8] sm:$0xff]
  %v16 = vld [vmem:[%s0 + $0x10] sm:$0xff]
  %v17 = vld [vmem:[%s0 + $0x18] sm:$0xff]
  %v18 = vld [vmem:[%s1] sm:$0xff]
  %v19 = vld [vmem:[%s1 + $0x8] sm:$0xff]
  %v20 = vld [vmem:[%s1 + $0x10] sm:$0xff]
  %v21 = vld [vmem:[%s1 + $0x18] sm:$0xff]
  %v22 = vld [vmem:[%s1 + $0x20] sm:$0xff]
  %v23 = vld [vmem:[%s1 + $0x28] sm:$0xff]
  %v24 = vld [vmem:[%s1 + $0x30] sm:$0xff]
  %v25 = vld [vmem:[%s1 + $0x38] sm:$0xff]
  %v26 = vld [vmem:[%s1 + $0x40] sm:$0xff]
  %v27 = vld [vmem:[%s1 + $0x48] sm:$0xff]
  %v28 = vld [vmem:[%s1 + $0x50] sm:$0xff]
  %v29 = vld [vmem:[%s1 + $0x58] sm:$0xff]
  %v30 = vld [vmem:[%s1 + $0x60] sm:$0xff]
  %v31 = vld [vmem:[%s1 + $0x68] sm:$0xff]
  %v32 = vld [vmem:[%s1 + $0x70] sm:$0xff]
  %v33 = vld [vmem:[%s1 + $0x78] sm:$0xff]
  %v34 = vld [vmem:[%s1 + $0x80] sm:$0xff]
  %v35 = vld [vmem:[%s1 + $0x88] sm:$0xff]
  %v36 = vld [vmem:[%s1 + $0x90] sm:$0xff]
  %v37 = vld [vmem:[%s1 + $0x98] sm:$0xff]
  %v38 = vld [vmem:[%s1 + $0xa0] sm:$0xff]
  %v39 = vld [vmem:[%s1 + $0xa8] sm:$0xff]
  %v40 = vld [vmem:[%s1 + $0xb0] sm:$0xff]
  %v41 = vld [vmem:[%s1 + $0xb8] sm:$0xff]
  %v42 = vld [vmem:[%s1 + $0xc0] sm:$0xff]
  %v43 = vld [vmem:[%s1 + $0xc8] sm:$0xff]
  %v44 = vld [vmem:[%s1 + $0xd0] sm:$0xff]
  %v45 = vld [vmem:[%s1 + $0xd8] sm:$0xff]
  %v46 = vld [vmem:[%s1 + $0xe0] sm:$0xff]
  %v47 = vld [vmem:[%s1 + $0xe8] sm:$0xff]
  %v48 = vld [vmem:[%s1 + $0xf0] sm:$0xff]
  %v49 = vld [vmem:[%s1 + $0xf8] sm:$0xff]
  %v50 = vld [vmem:[%s1 + $0x100] sm:$0xff]
  %v51 = vld [vmem:[%s1 + $0x108] sm:$0xff]
  %v52 = vld [vmem:[%s1 + $0x110] sm:$0xff]
  %v53 = vld [vmem:[%s1 + $0x118] sm:$0xff]
  %v54 = vld [vmem:[%s1 + $0x120] sm:$0xff]
  %v55 = vld [vmem:[%s1 + $0x128] sm:$0xff]
  %v56 = vld [vmem:[%s1 + $0x130] sm:$0xff]
  %v57 = vld [vmem:[%s1 + $0x138] sm:$0xff]
  %v58 = vld [vmem:[%s1 + $0x140] sm:$0xff]
  %v59 = vld [vmem:[%s1 + $0x148] sm:$0xff]
  %v60 = vld [vmem:[%s1 + $0x150] sm:$0xff]
  %v61 = vld [vmem:[%s1 + $0x158] sm:$0xff]
  %v62 = vld [vmem:[%s1 + $0x160] sm:$0xff]
  %v63 = vld [vmem:[%s1 + $0x168] sm:$0xff]
  %v64 = vld [vmem:[%s1 + $0x170] sm:$0xff]
  %v65 = vld [vmem:[%s1 + $0x178] sm:$0xff]
  %v66 = vld [vmem:[%s1 + $0x180] sm:$0xff]
  %v67 = vld [vmem:[%s1 + $0x188] sm:$0xff]
  %v68 = vld [vmem:[%s1 + $0x190] sm:$0xff]
  %v69 = vld [vmem:[%s1 + $0x198] sm:$0xff]
  %v70 = vld [vmem:[%s1 + $0x1a0] sm:$0xff]
  %v71 = vld [vmem:[%s1 + $0x1a8] sm:$0xff]
  %v72 = vld [vmem:[%s1 + $0x1b0] sm:$0xff]
  %v73 = vld [vmem:[%s1 + $0x1b8] sm:$0xff]
  %v74 = vld [vmem:[%s1 + $0x1c0] sm:$0xff]
  %v75 = vld [vmem:[%s1 + $0x1c8] sm:$0xff]
  %v76 = vld [vmem:[%s1 + $0x1d0] sm:$0xff]
  %v77 = vld [vmem:[%s1 + $0x1d8] sm:$0xff]
  %v78 = vld [vmem:[%s1 + $0x1e0] sm:$0xff]
  %v79 = vld [vmem:[%s1 + $0x1e8] sm:$0xff]
  %v80 = vld [vmem:[%s1 + $0x1f0] sm:$0xff]
  %v81 = vld [vmem:[%s1 + $0x1f8] sm:$0xff]
  %v82 = vld [vmem:[%s2] sm:$0xf]
  %v84 = vlaneseq
  %v85 = vshrl.u32 %v84, 7
  %v86 = vsub.s32 0, %v85
  %v87 = vrot.slane %v82, %v86
  %v88 = vlaneseq
  %v89 = vshrl.u32 %v88, 7
  %v90 = vsub.s32 1, %v89
  %v91 = vrot.slane %v82, %v90
  %v92 = vlaneseq
  %v93 = vshrl.u32 %v92, 7
  %v94 = vsub.s32 2, %v93
  %v95 = vrot.slane %v82, %v94
  %v96 = vlaneseq
  %v97 = vshrl.u32 %v96, 7
  %v98 = vsub.s32 3, %v97
  %v99 = vrot.slane %v82, %v98
  %v108 = vunpack.c.l.b16 %v14
  %v109 = vunpack.c.h.b16 %v14
  %v110 = vunpack.c.l.b16 %v15
  %v111 = vunpack.c.h.b16 %v15
  %v112 = vunpack.c.l.b16 %v16
  %v113 = vunpack.c.h.b16 %v16
  %v114 = vunpack.c.l.b16 %v17
  %v115 = vunpack.c.h.b16 %v17
  %v116 = vpack.c.b16 %v110, %v108
  %v117 = vpack.c.b16 %v111, %v109
  %v118 = vpack.c.b16 %v114, %v112
  %v119 = vpack.c.b16 %v115, %v113
  %v188 = vunpack.c.l.b16 %v18
  %v189 = vunpack.c.h.b16 %v18
  %v190 = vunpack.c.l.b16 %v19
  %v191 = vunpack.c.h.b16 %v19
  %v192 = vunpack.c.l.b16 %v20
  %v193 = vunpack.c.h.b16 %v20
  %v194 = vunpack.c.l.b16 %v21
  %v195 = vunpack.c.h.b16 %v21
  %v196 = vunpack.c.l.b16 %v22
  %v197 = vunpack.c.h.b16 %v22
  %v198 = vunpack.c.l.b16 %v23
  %v199 = vunpack.c.h.b16 %v23
  %v200 = vunpack.c.l.b16 %v24
  %v201 = vunpack.c.h.b16 %v24
  %v202 = vunpack.c.l.b16 %v25
  %v203 = vunpack.c.h.b16 %v25
  %v204 = vunpack.c.l.b16 %v26
  %v205 = vunpack.c.h.b16 %v26
  %v206 = vunpack.c.l.b16 %v27
  %v207 = vunpack.c.h.b16 %v27
  %v208 = vunpack.c.l.b16 %v28
  %v209 = vunpack.c.h.b16 %v28
  %v210 = vunpack.c.l.b16 %v29
  %v211 = vunpack.c.h.b16 %v29
  %v212 = vunpack.c.l.b16 %v30
  %v213 = vunpack.c.h.b16 %v30
  %v214 = vunpack.c.l.b16 %v31
  %v215 = vunpack.c.h.b16 %v31
  %v216 = vunpack.c.l.b16 %v32
  %v217 = vunpack.c.h.b16 %v32
  %v218 = vunpack.c.l.b16 %v33
  %v219 = vunpack.c.h.b16 %v33
  %v220 = vunpack.c.l.b16 %v34
  %v221 = vunpack.c.h.b16 %v34
  %v222 = vunpack.c.l.b16 %v35
  %v223 = vunpack.c.h.b16 %v35
  %v224 = vunpack.c.l.b16 %v36
  %v225 = vunpack.c.h.b16 %v36
  %v226 = vunpack.c.l.b16 %v37
  %v227 = vunpack.c.h.b16 %v37
  %v228 = vunpack.c.l.b16 %v38
  %v229 = vunpack.c.h.b16 %v38
  %v230 = vunpack.c.l.b16 %v39
  %v231 = vunpack.c.h.b16 %v39
  %v232 = vunpack.c.l.b16 %v40
  %v233 = vunpack.c.h.b16 %v40
  %v234 = vunpack.c.l.b16 %v41
  %v235 = vunpack.c.h.b16 %v41
  %v236 = vunpack.c.l.b16 %v42
  %v237 = vunpack.c.h.b16 %v42
  %v238 = vunpack.c.l.b16 %v43
  %v239 = vunpack.c.h.b16 %v43
  %v240 = vunpack.c.l.b16 %v44
  %v241 = vunpack.c.h.b16 %v44
  %v242 = vunpack.c.l.b16 %v45
  %v243 = vunpack.c.h.b16 %v45
  %v244 = vunpack.c.l.b16 %v46
  %v245 = vunpack.c.h.b16 %v46
  %v246 = vunpack.c.l.b16 %v47
  %v247 = vunpack.c.h.b16 %v47
  %v248 = vunpack.c.l.b16 %v48
  %v249 = vunpack.c.h.b16 %v48
  %v250 = vunpack.c.l.b16 %v49
  %v251 = vunpack.c.h.b16 %v49
  %v252 = vunpack.c.l.b16 %v50
  %v253 = vunpack.c.h.b16 %v50
  %v254 = vunpack.c.l.b16 %v51
  %v255 = vunpack.c.h.b16 %v51
  %v256 = vunpack.c.l.b16 %v52
  %v257 = vunpack.c.h.b16 %v52
  %v258 = vunpack.c.l.b16 %v53
  %v259 = vunpack.c.h.b16 %v53
  %v260 = vunpack.c.l.b16 %v54
  %v261 = vunpack.c.h.b16 %v54
  %v262 = vunpack.c.l.b16 %v55
  %v263 = vunpack.c.h.b16 %v55
  %v264 = vunpack.c.l.b16 %v56
  %v265 = vunpack.c.h.b16 %v56
  %v266 = vunpack.c.l.b16 %v57
  %v267 = vunpack.c.h.b16 %v57
  %v268 = vunpack.c.l.b16 %v58
  %v269 = vunpack.c.h.b16 %v58
  %v270 = vunpack.c.l.b16 %v59
  %v271 = vunpack.c.h.b16 %v59
  %v272 = vunpack.c.l.b16 %v60
  %v273 = vunpack.c.h.b16 %v60
  %v274 = vunpack.c.l.b16 %v61
  %v275 = vunpack.c.h.b16 %v61
  %v276 = vunpack.c.l.b16 %v62
  %v277 = vunpack.c.h.b16 %v62
  %v278 = vunpack.c.l.b16 %v63
  %v279 = vunpack.c.h.b16 %v63
  %v280 = vunpack.c.l.b16 %v64
  %v281 = vunpack.c.h.b16 %v64
  %v282 = vunpack.c.l.b16 %v65
  %v283 = vunpack.c.h.b16 %v65
  %v284 = vunpack.c.l.b16 %v66
  %v285 = vunpack.c.h.b16 %v66
  %v286 = vunpack.c.l.b16 %v67
  %v287 = vunpack.c.h.b16 %v67
  %v288 = vunpack.c.l.b16 %v68
  %v289 = vunpack.c.h.b16 %v68
  %v290 = vunpack.c.l.b16 %v69
  %v291 = vunpack.c.h.b16 %v69
  %v292 = vunpack.c.l.b16 %v70
  %v293 = vunpack.c.h.b16 %v70
  %v294 = vunpack.c.l.b16 %v71
  %v295 = vunpack.c.h.b16 %v71
  %v296 = vunpack.c.l.b16 %v72
  %v297 = vunpack.c.h.b16 %v72
  %v298 = vunpack.c.l.b16 %v73
  %v299 = vunpack.c.h.b16 %v73
  %v300 = vunpack.c.l.b16 %v74
  %v301 = vunpack.c.h.b16 %v74
  %v302 = vunpack.c.l.b16 %v75
  %v303 = vunpack.c.h.b16 %v75
  %v304 = vunpack.c.l.b16 %v76
  %v305 = vunpack.c.h.b16 %v76
  %v306 = vunpack.c.l.b16 %v77
  %v307 = vunpack.c.h.b16 %v77
  %v308 = vunpack.c.l.b16 %v78
  %v309 = vunpack.c.h.b16 %v78
  %v310 = vunpack.c.l.b16 %v79
  %v311 = vunpack.c.h.b16 %v79
  %v312 = vunpack.c.l.b16 %v80
  %v313 = vunpack.c.h.b16 %v80
  %v314 = vunpack.c.l.b16 %v81
  %v315 = vunpack.c.h.b16 %v81
  %v316 = vpack.c.b16 %v192, %v188
  %v317 = vpack.c.b16 %v193, %v189
  %v318 = vpack.c.b16 %v194, %v190
  %v319 = vpack.c.b16 %v195, %v191
  %v320 = vpack.c.b16 %v200, %v196
  %v321 = vpack.c.b16 %v201, %v197
  %v322 = vpack.c.b16 %v202, %v198
  %v323 = vpack.c.b16 %v203, %v199
  %v324 = vpack.c.b16 %v208, %v204
  %v325 = vpack.c.b16 %v209, %v205
  %v326 = vpack.c.b16 %v210, %v206
  %v327 = vpack.c.b16 %v211, %v207
  %v328 = vpack.c.b16 %v216, %v212
  %v329 = vpack.c.b16 %v217, %v213
  %v330 = vpack.c.b16 %v218, %v214
  %v331 = vpack.c.b16 %v219, %v215
  %v332 = vpack.c.b16 %v224, %v220
  %v333 = vpack.c.b16 %v225, %v221
  %v334 = vpack.c.b16 %v226, %v222
  %v335 = vpack.c.b16 %v227, %v223
  %v336 = vpack.c.b16 %v232, %v228
  %v337 = vpack.c.b16 %v233, %v229
  %v338 = vpack.c.b16 %v234, %v230
  %v339 = vpack.c.b16 %v235, %v231
  %v340 = vpack.c.b16 %v240, %v236
  %v341 = vpack.c.b16 %v241, %v237
  %v342 = vpack.c.b16 %v242, %v238
  %v343 = vpack.c.b16 %v243, %v239
  %v344 = vpack.c.b16 %v248, %v244
  %v345 = vpack.c.b16 %v249, %v245
  %v346 = vpack.c.b16 %v250, %v246
  %v347 = vpack.c.b16 %v251, %v247
  %v348 = vpack.c.b16 %v256, %v252
  %v349 = vpack.c.b16 %v257, %v253
  %v350 = vpack.c.b16 %v258, %v254
  %v351 = vpack.c.b16 %v259, %v255
  %v352 = vpack.c.b16 %v264, %v260
  %v353 = vpack.c.b16 %v265, %v261
  %v354 = vpack.c.b16 %v266, %v262
  %v355 = vpack.c.b16 %v267, %v263
  %v356 = vpack.c.b16 %v272, %v268
  %v357 = vpack.c.b16 %v273, %v269
  %v358 = vpack.c.b16 %v274, %v270
  %v359 = vpack.c.b16 %v275, %v271
  %v360 = vpack.c.b16 %v280, %v276
  %v361 = vpack.c.b16 %v281, %v277
  %v362 = vpack.c.b16 %v282, %v278
  %v363 = vpack.c.b16 %v283, %v279
  %v364 = vpack.c.b16 %v288, %v284
  %v365 = vpack.c.b16 %v289, %v285
  %v366 = vpack.c.b16 %v290, %v286
  %v367 = vpack.c.b16 %v291, %v287
  %v368 = vpack.c.b16 %v296, %v292
  %v369 = vpack.c.b16 %v297, %v293
  %v370 = vpack.c.b16 %v298, %v294
  %v371 = vpack.c.b16 %v299, %v295
  %v372 = vpack.c.b16 %v304, %v300
  %v373 = vpack.c.b16 %v305, %v301
  %v374 = vpack.c.b16 %v306, %v302
  %v375 = vpack.c.b16 %v307, %v303
  %v376 = vpack.c.b16 %v312, %v308
  %v377 = vpack.c.b16 %v313, %v309
  %v378 = vpack.c.b16 %v314, %v310
  %v379 = vpack.c.b16 %v315, %v311
  %444 = vmatprep.subr.bf16.mxu0 %v317
  %445 = vmatpush1.bf16.msra.mxu0 %v316
  %446 = vmatprep.subr.bf16.mxu0 %v321
  %447 = vmatpush1.bf16.msra.mxu0 %v320
  %448 = vmatprep.subr.bf16.mxu0 %v325
  %449 = vmatpush1.bf16.msra.mxu0 %v324
  %450 = vmatprep.subr.bf16.mxu0 %v329
  %451 = vmatpush1.bf16.msra.mxu0 %v328
  %452 = vmatprep.subr.bf16.mxu0 %v333
  %453 = vmatpush1.bf16.msra.mxu0 %v332
  %454 = vmatprep.subr.bf16.mxu0 %v337
  %455 = vmatpush1.bf16.msra.mxu0 %v336
  %456 = vmatprep.subr.bf16.mxu0 %v341
  %457 = vmatpush1.bf16.msra.mxu0 %v340
  %458 = vmatprep.subr.bf16.mxu0 %v345
  %459 = vmatpush1.bf16.msra.mxu0 %v344
  %460 = vmatprep.subr.bf16.mxu0 %v349
  %461 = vmatpush1.bf16.msra.mxu0 %v348
  %462 = vmatprep.subr.bf16.mxu0 %v353
  %463 = vmatpush1.bf16.msra.mxu0 %v352
  %464 = vmatprep.subr.bf16.mxu0 %v357
  %465 = vmatpush1.bf16.msra.mxu0 %v356
  %466 = vmatprep.subr.bf16.mxu0 %v361
  %467 = vmatpush1.bf16.msra.mxu0 %v360
  %468 = vmatprep.subr.bf16.mxu0 %v365
  %469 = vmatpush1.bf16.msra.mxu0 %v364
  %470 = vmatprep.subr.bf16.mxu0 %v369
  %471 = vmatpush1.bf16.msra.mxu0 %v368
  %472 = vmatprep.subr.bf16.mxu0 %v373
  %473 = vmatpush1.bf16.msra.mxu0 %v372
  %474 = vmatprep.subr.bf16.mxu0 %v377
  %475 = vmatpush1.bf16.msra.mxu0 %v376
  %476 = vmatprep.mubr.bf16.mxu0 %v117
  %477 = vmatmul.mubr.bf16.gmra.mrb[0].mxu0 %v116
  %v478 = vpop.f32.mrb[0].mxu0
  %v479 = vadd.f32 %v87, %v478
  %v480 = vpop.f32.mrb[0].mxu0
  %v481 = vadd.f32 %v91, %v480
  %v482 = vpop.f32.mrb[0].mxu0
  %v483 = vadd.f32 %v87, %v482
  %v484 = vpop.f32.mrb[0].mxu0
  %v485 = vadd.f32 %v91, %v484
  %486 = vmatprep.mubr.bf16.mxu0 %v119
  %487 = vmatmul.mubr.bf16.gmra.mrb[0].mxu0 %v118
  %v488 = vpop.f32.mrb[0].mxu0
  %v489 = vadd.f32 %v87, %v488
  %v490 = vpop.f32.mrb[0].mxu0
  %v491 = vadd.f32 %v91, %v490
  %v492 = vpop.f32.mrb[0].mxu0
  %v493 = vadd.f32 %v87, %v492
  %v494 = vpop.f32.mrb[0].mxu0
  %v495 = vadd.f32 %v91, %v494
  %496 = vdwg.mxu0
  %497 = vmatprep.subr.bf16.mxu0 %v319
  %498 = vmatpush1.bf16.msra.mxu0 %v318
  %499 = vmatprep.subr.bf16.mxu0 %v323
  %500 = vmatpush1.bf16.msra.mxu0 %v322
  %501 = vmatprep.subr.bf16.mxu0 %v327
  %502 = vmatpush1.bf16.msra.mxu0 %v326
  %503 = vmatprep.subr.bf16.mxu0 %v331
  %504 = vmatpush1.bf16.msra.mxu0 %v330
  %505 = vmatprep.subr.bf16.mxu0 %v335
  %506 = vmatpush1.bf16.msra.mxu0 %v334
  %507 = vmatprep.subr.bf16.mxu0 %v339
  %508 = vmatpush1.bf16.msra.mxu0 %v338
  %509 = vmatprep.subr.bf16.mxu0 %v343
  %510 = vmatpush1.bf16.msra.mxu0 %v342
  %511 = vmatprep.subr.bf16.mxu0 %v347
  %512 = vmatpush1.bf16.msra.mxu0 %v346
  %513 = vmatprep.subr.bf16.mxu0 %v351
  %514 = vmatpush1.bf16.msra.mxu0 %v350
  %515 = vmatprep.subr.bf16.mxu0 %v355
  %516 = vmatpush1.bf16.msra.mxu0 %v354
  %517 = vmatprep.subr.bf16.mxu0 %v359
  %518 = vmatpush1.bf16.msra.mxu0 %v358
  %519 = vmatprep.subr.bf16.mxu0 %v363
  %520 = vmatpush1.bf16.msra.mxu0 %v362
  %521 = vmatprep.subr.bf16.mxu0 %v367
  %522 = vmatpush1.bf16.msra.mxu0 %v366
  %523 = vmatprep.subr.bf16.mxu0 %v371
  %524 = vmatpush1.bf16.msra.mxu0 %v370
  %525 = vmatprep.subr.bf16.mxu0 %v375
  %526 = vmatpush1.bf16.msra.mxu0 %v374
  %527 = vmatprep.subr.bf16.mxu0 %v379
  %528 = vmatpush1.bf16.msra.mxu0 %v378
  %529 = vmatprep.mubr.bf16.mxu0 %v117
  %530 = vmatmul.mubr.bf16.gmra.mrb[0].mxu0 %v116
  %v531 = vpop.f32.mrb[0].mxu0
  %v532 = vadd.f32 %v95, %v531
  %v533 = vpop.f32.mrb[0].mxu0
  %v534 = vadd.f32 %v99, %v533
  %v535 = vpop.f32.mrb[0].mxu0
  %v536 = vadd.f32 %v95, %v535
  %v537 = vpop.f32.mrb[0].mxu0
  %v538 = vadd.f32 %v99, %v537
  %539 = vmatprep.mubr.bf16.mxu0 %v119
  %540 = vmatmul.mubr.bf16.gmra.mrb[0].mxu0 %v118
  %v541 = vpop.f32.mrb[0].mxu0
  %v542 = vadd.f32 %v95, %v541
  %v543 = vpop.f32.mrb[0].mxu0
  %v544 = vadd.f32 %v99, %v543
  %v545 = vpop.f32.mrb[0].mxu0
  %v546 = vadd.f32 %v95, %v545
  %v547 = vpop.f32.mrb[0].mxu0
  %v548 = vadd.f32 %v99, %v547
  %549 = vdwg.mxu0
  %v550 = vmax.f32 %v479, 0.0
  %v551 = vmax.f32 %v481, 0.0
  %v552 = vmax.f32 %v532, 0.0
  %v553 = vmax.f32 %v534, 0.0
  %v554 = vmax.f32 %v483, 0.0
  %v555 = vmax.f32 %v485, 0.0
  %v556 = vmax.f32 %v536, 0.0
  %v557 = vmax.f32 %v538, 0.0
  %v558 = vmax.f32 %v489, 0.0
  %v559 = vmax.f32 %v491, 0.0
  %v560 = vmax.f32 %v542, 0.0
  %v561 = vmax.f32 %v544, 0.0
  %v562 = vmax.f32 %v493, 0.0
  %v563 = vmax.f32 %v495, 0.0
  %v564 = vmax.f32 %v546, 0.0
  %v565 = vmax.f32 %v548, 0.0
  %566 = vst [vmem:[%s3] sm:$0xff] %v550
  %567 = vst [vmem:[%s3 + $0x8] sm:$0xff] %v551
  %568 = vst [vmem:[%s3 + $0x10] sm:$0xff] %v552
  %569 = vst [vmem:[%s3 + $0x18] sm:$0xff] %v553
  %570 = vst [vmem:[%s3 + $0x20] sm:$0xff] %v554
  %571 = vst [vmem:[%s3 + $0x28] sm:$0xff] %v555
  %572 = vst [vmem:[%s3 + $0x30] sm:$0xff] %v556
  %573 = vst [vmem:[%s3 + $0x38] sm:$0xff] %v557
  %574 = vst [vmem:[%s3 + $0x40] sm:$0xff] %v558
  %575 = vst [vmem:[%s3 + $0x48] sm:$0xff] %v559
  %576 = vst [vmem:[%s3 + $0x50] sm:$0xff] %v560
  %577 = vst [vmem:[%s3 + $0x58] sm:$0xff] %v561
  %578 = vst [vmem:[%s3 + $0x60] sm:$0xff] %v562
  %579 = vst [vmem:[%s3 + $0x68] sm:$0xff] %v563
  %580 = vst [vmem:[%s3 + $0x70] sm:$0xff] %v564
  %581 = vst [vmem:[%s3 + $0x78] sm:$0xff] %v565
  // Predicated region
  $region14: #{forward.1} parent=0 // pred_check
    _
  $region15: #{forward.1} parent=0 // pred_check_branch
    %583 = sbr.rel (0) target = $region17
  $region16: #{forward.1} parent=0 // pred_region
    _
  $region17: #{forward.1} parent=0 // pred_fallthru
    _
  // Predicated region
  $region18: #{forward.1} parent=0 // pred_check
    _
  $region19: #{forward.1} parent=0 // pred_check_branch
    %585 = sbr.rel (0) target = $region21
  $region20: #{forward.1} parent=0 // pred_region
    _
  $region21: #{forward.1} parent=0 // pred_fallthru
    _

</llo_original>
